<compile_context>
chip_gen: v7x
topology: tpu7x:2x2x1
jax: 0.10.0
libtpu: 0.0.40
codegen_flags: <defaults>
</compile_context>

<pallas_src>
import math
import functools

import jax
import jax.numpy as jnp
from jax import lax
from jax.experimental import pallas as pl
from jax.experimental.pallas import tpu as pltpu

PI_T = 3.14159265  # exact constant used by the PyTorch module


def _round_up(x, n):
    return ((x + n - 1) // n) * n


def _chebyshev_cos_m(c, m):
    """cos(m*theta) as a polynomial in c = cos(theta) (Horner on c^2)."""
    if m == 0:
        return jnp.ones_like(c)
    if m == 1:
        return c
    c2 = c * c
    if m == 2:
        return 2.0 * c2 - 1.0
    if m == 3:
        return (4.0 * c2 - 3.0) * c
    if m == 4:
        return (8.0 * c2 - 8.0) * c2 + 1.0
    if m == 5:
        return ((16.0 * c2 - 20.0) * c2 + 5.0) * c
    raise ValueError("m must be in [0, 5]")


def angle_linear_kernel(x_ref, w_ref, xlen_ref, invc_ref, cos_ref, phi_ref,
                        *, m, tb, x_resident):
    # Grid is (N-tiles, B-tiles); axis 1 (batch) is innermost.
    i = pl.program_id(1)
    row0 = pl.multiple_of(i * tb, tb)

    if x_resident:
        x_tile = x_ref[pl.ds(row0, tb), :]      # (TB, D) bf16, sliced from resident x
    else:
        x_tile = x_ref[...]                     # (TB, D) bf16, tiled by BlockSpec

    xlen = xlen_ref[pl.ds(row0, tb), :]         # (TB, 1) f32 (resident)
    inv_col = invc_ref[...]                     # (1, TN) f32

    # MXU matmul on bf16 tiles, f32 accumulation.
    raw = jnp.dot(x_tile, w_ref[...], preferred_element_type=jnp.float32)

    # 1/||x|| on the EUP (approx reciprocal is essentially free here).
    inv_xlen = pl.reciprocal(xlen, approx=True)

    # Column renorm scale of ww cancels exactly against wlen:
    # cos_theta = (x @ w) / (||x|| * ||w_col||).
    c = raw * inv_col * inv_xlen
    c = jnp.clip(c, -1.0, 1.0)

    cos_m_theta = _chebyshev_cos_m(c, m)

    # k = floor(m * acos(c) / PI_T) without acos:
    #   acos(c) >= j*PI_T/m  <=>  c <= cos(j*PI_T/m)   (acos decreasing).
    # (-1)^k accumulated multiplicatively (no floating mod).
    k = jnp.zeros_like(c)
    sign = jnp.ones_like(c)
    for j in range(1, m + 1):
        le = c <= math.cos(j * PI_T / m)
        k = k + jnp.where(le, 1.0, 0.0)
        sign = jnp.where(le, -sign, sign)

    phi = sign * cos_m_theta - 2.0 * k

    cos_ref[...] = (c * xlen).astype(cos_ref.dtype)
    phi_ref[...] = (phi * xlen).astype(phi_ref.dtype)
    # TODO(synk): phiflag=False (myphi Taylor-series) branch not implemented;
    # only the module-default phiflag=True path is covered.


def prepare_weight(w, *, block_n=1024):
    """Weight-side preprocessing (cacheable: recompute only when w changes)."""
    D, N = w.shape
    w32 = w.astype(jnp.float32)
    wsq = jnp.sum(w32 * w32, axis=0, keepdims=True)        # (1, N)
    inv_col = lax.rsqrt(wsq)                                # 1/||w_col||
    TN = min(block_n, _round_up(N, 128))
    Np = _round_up(N, TN)
    w_bf = jnp.pad(w32, ((0, 0), (0, Np - N))).astype(jnp.bfloat16)
    invc_p = jnp.pad(inv_col, ((0, 0), (0, Np - N)))
    return {"w_bf": w_bf, "inv_col": invc_p, "D": D, "N": N, "Np": Np, "TN": TN}


def angle_linear(x, w=None, m=4, *, block_b=256, block_n=1024,
                 out_dtype=jnp.float32, prepared_w=None):
    """cos_theta, phi_theta = AngleLinear(in_f, out_f, m).forward(x)."""
    if prepared_w is None:
        prepared_w = prepare_weight(w, block_n=block_n)

    B, D = x.shape
    assert D == prepared_w["D"]
    N, Np, TN = prepared_w["N"], prepared_w["Np"], prepared_w["TN"]
    w_bf, invc_p = prepared_w["w_bf"], prepared_w["inv_col"]

    x32 = x.astype(jnp.float32)
    xsq = jnp.sum(x32 * x32, axis=1, keepdims=True)         # (B, 1)
    xlen = jnp.sqrt(xsq)                                    # (B, 1)

    # Tile sizes: B padded to bf16 sublane packing (16), N to lane width (128).
    TB = min(block_b, _round_up(B, 16))
    Bp = _round_up(B, TB)

    # Pad x rows with zeros; pad xlen with 1.0 so padded rows stay finite.
    x_bf = jnp.pad(x32, ((0, Bp - B), (0, 0))).astype(jnp.bfloat16)
    xlen_p = jnp.pad(xlen, ((0, Bp - B), (0, 0)), constant_values=1.0)

    # Keep the whole (padded) x resident in VMEM when it is small enough; then
    # w is read from HBM exactly once across the entire grid.
    x_resident = (Bp * D * 2) <= (8 << 20)

    # Grid: N tiles outer, B tiles inner -> the w tile index is constant across
    # the inner axis, so Pallas does not re-DMA it per batch tile.
    grid = (Np // TN, Bp // TB)

    if x_resident:
        x_spec = pl.BlockSpec((Bp, D), lambda j, i: (0, 0))
    else:
        x_spec = pl.BlockSpec((TB, D), lambda j, i: (i, 0))

    in_specs = [
        x_spec,                                             # x (bf16)
        pl.BlockSpec((D, TN), lambda j, i: (0, j)),         # w tile (bf16)
        pl.BlockSpec((Bp, 1), lambda j, i: (0, 0)),         # xlen (resident)
        pl.BlockSpec((1, TN), lambda j, i: (0, j)),         # 1/||w_col||
    ]
    out_specs = (
        pl.BlockSpec((TB, TN), lambda j, i: (i, j)),
        pl.BlockSpec((TB, TN), lambda j, i: (i, j)),
    )

    out_bytes = jnp.dtype(out_dtype).itemsize
    cost = pl.CostEstimate(
        flops=2 * Bp * D * Np,
        transcendentals=0,
        bytes_accessed=(Bp * D + D * Np) * 2 + 2 * Bp * Np * out_bytes,
    )

    # VMEM footprint estimate; only raise the scoped limit when needed (v5e's
    # default is 16 MiB).  Cap at 64 MiB (v7x physical per-TC VMEM).
    vmem_est = (
        (Bp * D * 2 if x_resident else 2 * TB * D * 2)      # x
        + 2 * D * TN * 2                                    # w (double-buffered)
        + Bp * 128 * 4 + 2 * 8 * TN * 4                     # xlen / inv_col (lane/sublane padded)
        + 2 * 2 * TB * TN * out_bytes                       # two outputs, double-buffered
        + 8 * TB * TN * 4                                   # f32 elementwise temporaries
    )
    vmem_limit = None
    if vmem_est > 12 * 1024 * 1024:
        vmem_limit = min(int(vmem_est * 2), 64 * 1024 * 1024)

    kernel = functools.partial(angle_linear_kernel, m=m, tb=TB,
                               x_resident=x_resident)

    cos_p, phi_p = pl.pallas_call(
        kernel,
        grid=grid,
        in_specs=in_specs,
        out_specs=out_specs,
        out_shape=(
            jax.ShapeDtypeStruct((Bp, Np), out_dtype),
            jax.ShapeDtypeStruct((Bp, Np), out_dtype),
        ),
        compiler_params=pltpu.CompilerParams(
            dimension_semantics=("parallel", "parallel"),
            vmem_limit_bytes=vmem_limit),
        cost_estimate=cost,
    )(x_bf, w_bf, xlen_p, invc_p)

    return cos_p[:B, :N], phi_p[:B, :N]


if __name__ == "__main__":
    key = jax.random.PRNGKey(0)
    kx, kw = jax.random.split(key)

    B, in_features, out_features = 8, 32, 128

    x = jax.random.normal(kx, (B, in_features), dtype=jnp.float32)
    # Weight init mirroring __init__: uniform(-1, 1); the forward's column
    # renorm is folded in algebraically by the kernel.
    w = jax.random.uniform(kw, (in_features, out_features),
                           minval=-1.0, maxval=1.0, dtype=jnp.float32)

    # Weight-side preprocessing hoisted out of the hot path (cacheable).
    w_prep = prepare_weight(w)

    cos_theta, phi_theta = angle_linear(x, m=4, prepared_w=w_prep)
    jax.block_until_ready((cos_theta, phi_theta))
    assert cos_theta.shape == (B, out_features)
    assert phi_theta.shape == (B, out_features)
    assert bool(jnp.all(jnp.isfinite(cos_theta)))
    assert bool(jnp.all(jnp.isfinite(phi_theta)))
    assert bool(jnp.all(jnp.abs(cos_theta) <= jnp.linalg.norm(x, axis=1, keepdims=True) + 1e-3))
    print("KERNEL_OK")
</pallas_src>

<mosaic_0001>
module attributes {stable_mosaic.version = 11 : i64} {
  func.func @angle_linear_kernel(%arg0: i32, %arg1: i32, %arg2: memref<16x32xbf16, #tpu.memory_space<vmem>>, %arg3: memref<32x128xbf16, #tpu.memory_space<vmem>>, %arg4: memref<16x1xf32, #tpu.memory_space<vmem>>, %arg5: memref<1x128xf32, #tpu.memory_space<vmem>>, %arg6: memref<16x128xf32, #tpu.memory_space<vmem>>, %arg7: memref<16x128xf32, #tpu.memory_space<vmem>>) attributes {dimension_semantics = [#tpu.dimension_semantics<parallel>, #tpu.dimension_semantics<parallel>], iteration_bounds = array<i64: 1, 1>, scalar_prefetch = 0 : i64, scratch_operands = 0 : i64, tpu.core_type = #tpu.core_type<tc>, window_params = [{pipeline_mode = #tpu.pipeline_mode<synchronous>, transform_indices = @transform_0, window_bounds = array<i64: 16, 32>}, {transform_indices = @transform_1, window_bounds = array<i64: 32, 128>}, {pipeline_mode = #tpu.pipeline_mode<synchronous>, transform_indices = @transform_2, window_bounds = array<i64: 16, 1>}, {transform_indices = @transform_3, window_bounds = array<i64: 1, 128>}, {transform_indices = @transform_4, window_bounds = array<i64: 16, 128>}, {transform_indices = @transform_5, window_bounds = array<i64: 16, 128>}]} {
    %c16_i32 = arith.constant 16 : i32
    %0 = arith.muli %arg1, %c16_i32 : i32
    %1 = tpu.assume_multiple %0, 16 : i32
    %2 = arith.index_cast %1 : i32 to index
    %c0 = arith.constant 0 : index
    %3 = vector.load %arg2[%2, %c0] : memref<16x32xbf16, #tpu.memory_space<vmem>>, vector<16x32xbf16>
    %4 = arith.index_cast %1 : i32 to index
    %c0_0 = arith.constant 0 : index
    %5 = vector.load %arg4[%4, %c0_0] : memref<16x1xf32, #tpu.memory_space<vmem>>, vector<16x1xf32>
    %c0_1 = arith.constant 0 : index
    %c0_2 = arith.constant 0 : index
    %6 = vector.load %arg5[%c0_1, %c0_2] : memref<1x128xf32, #tpu.memory_space<vmem>>, vector<1x128xf32>
    %c0_3 = arith.constant 0 : index
    %c0_4 = arith.constant 0 : index
    %7 = vector.load %arg3[%c0_3, %c0_4] : memref<32x128xbf16, #tpu.memory_space<vmem>>, vector<32x128xbf16>
    %cst = arith.constant dense<0.000000e+00> : vector<16x128xf32>
    %8 = tpu.matmul %3, %7, %cst {dimension_numbers = #tpu.dot_dimension_numbers<[1], [0], [0], [1], [0, 0, 1, 1], [], []>} : vector<16x32xbf16>, vector<32x128xbf16>, vector<16x128xf32> -> vector<16x128xf32>
    %9 = tpu.reciprocal %5 {approx = true} : vector<16x1xf32> -> vector<16x1xf32>
    %10 = vector.broadcast %6 : vector<1x128xf32> to vector<16x128xf32>
    %11 = arith.mulf %8, %10 : vector<16x128xf32>
    %12 = vector.broadcast %9 : vector<16x1xf32> to vector<16x128xf32>
    %13 = arith.mulf %11, %12 : vector<16x128xf32>
    %cst_5 = arith.constant -1.000000e+00 : f32
    %cst_6 = arith.constant 1.000000e+00 : f32
    %14 = vector.broadcast %cst_5 : f32 to vector<16x128xf32>
    %15 = arith.maximumf %14, %13 : vector<16x128xf32>
    %16 = vector.broadcast %cst_6 : f32 to vector<16x128xf32>
    %17 = arith.minimumf %16, %15 : vector<16x128xf32>
    %18 = arith.mulf %17, %17 : vector<16x128xf32>
    %cst_7 = arith.constant 8.000000e+00 : f32
    %19 = vector.broadcast %cst_7 : f32 to vector<16x128xf32>
    %20 = arith.mulf %19, %18 : vector<16x128xf32>
    %cst_8 = arith.constant 8.000000e+00 : f32
    %21 = vector.broadcast %cst_8 : f32 to vector<16x128xf32>
    %22 = arith.subf %20, %21 : vector<16x128xf32>
    %23 = arith.mulf %22, %18 : vector<16x128xf32>
    %cst_9 = arith.constant 1.000000e+00 : f32
    %24 = vector.broadcast %cst_9 : f32 to vector<16x128xf32>
    %25 = arith.addf %23, %24 : vector<16x128xf32>
    %cst_10 = arith.constant 0.000000e+00 : f32
    %26 = vector.broadcast %cst_10 : f32 to vector<16x128xf32>
    %cst_11 = arith.constant 1.000000e+00 : f32
    %27 = vector.broadcast %cst_11 : f32 to vector<16x128xf32>
    %cst_12 = arith.constant 0.707106769 : f32
    %28 = vector.broadcast %cst_12 : f32 to vector<16x128xf32>
    %29 = arith.cmpf ole, %17, %28 : vector<16x128xf32>
    %cst_13 = arith.constant 1.000000e+00 : f32
    %cst_14 = arith.constant 0.000000e+00 : f32
    %30 = vector.broadcast %cst_13 : f32 to vector<16x128xf32>
    %31 = vector.broadcast %cst_14 : f32 to vector<16x128xf32>
    %32 = arith.select %29, %30, %31 : vector<16x128xi1>, vector<16x128xf32>
    %33 = arith.addf %26, %32 : vector<16x128xf32>
    %cst_15 = arith.constant 0.000000e+00 : f32
    %34 = vector.broadcast %cst_15 : f32 to vector<16x128xf32>
    %35 = arith.subf %34, %27 : vector<16x128xf32>
    %36 = arith.select %29, %35, %27 : vector<16x128xi1>, vector<16x128xf32>
    %cst_16 = arith.constant 1.79489656E-9 : f32
    %37 = vector.broadcast %cst_16 : f32 to vector<16x128xf32>
    %38 = arith.cmpf ole, %17, %37 : vector<16x128xf32>
    %cst_17 = arith.constant 1.000000e+00 : f32
    %cst_18 = arith.constant 0.000000e+00 : f32
    %39 = vector.broadcast %cst_17 : f32 to vector<16x128xf32>
    %40 = vector.broadcast %cst_18 : f32 to vector<16x128xf32>
    %41 = arith.select %38, %39, %40 : vector<16x128xi1>, vector<16x128xf32>
    %42 = arith.addf %33, %41 : vector<16x128xf32>
    %cst_19 = arith.constant 0.000000e+00 : f32
    %43 = vector.broadcast %cst_19 : f32 to vector<16x128xf32>
    %44 = arith.subf %43, %36 : vector<16x128xf32>
    %45 = arith.select %38, %44, %36 : vector<16x128xi1>, vector<16x128xf32>
    %cst_20 = arith.constant -0.707106769 : f32
    %46 = vector.broadcast %cst_20 : f32 to vector<16x128xf32>
    %47 = arith.cmpf ole, %17, %46 : vector<16x128xf32>
    %cst_21 = arith.constant 1.000000e+00 : f32
    %cst_22 = arith.constant 0.000000e+00 : f32
    %48 = vector.broadcast %cst_21 : f32 to vector<16x128xf32>
    %49 = vector.broadcast %cst_22 : f32 to vector<16x128xf32>
    %50 = arith.select %47, %48, %49 : vector<16x128xi1>, vector<16x128xf32>
    %51 = arith.addf %42, %50 : vector<16x128xf32>
    %cst_23 = arith.constant 0.000000e+00 : f32
    %52 = vector.broadcast %cst_23 : f32 to vector<16x128xf32>
    %53 = arith.subf %52, %45 : vector<16x128xf32>
    %54 = arith.select %47, %53, %45 : vector<16x128xi1>, vector<16x128xf32>
    %cst_24 = arith.constant -1.000000e+00 : f32
    %55 = vector.broadcast %cst_24 : f32 to vector<16x128xf32>
    %56 = arith.cmpf ole, %17, %55 : vector<16x128xf32>
    %cst_25 = arith.constant 1.000000e+00 : f32
    %cst_26 = arith.constant 0.000000e+00 : f32
    %57 = vector.broadcast %cst_25 : f32 to vector<16x128xf32>
    %58 = vector.broadcast %cst_26 : f32 to vector<16x128xf32>
    %59 = arith.select %56, %57, %58 : vector<16x128xi1>, vector<16x128xf32>
    %60 = arith.addf %51, %59 : vector<16x128xf32>
    %cst_27 = arith.constant 0.000000e+00 : f32
    %61 = vector.broadcast %cst_27 : f32 to vector<16x128xf32>
    %62 = arith.subf %61, %54 : vector<16x128xf32>
    %63 = arith.select %56, %62, %54 : vector<16x128xi1>, vector<16x128xf32>
    %64 = arith.mulf %63, %25 : vector<16x128xf32>
    %cst_28 = arith.constant 2.000000e+00 : f32
    %65 = vector.broadcast %cst_28 : f32 to vector<16x128xf32>
    %66 = arith.mulf %65, %60 : vector<16x128xf32>
    %67 = arith.subf %64, %66 : vector<16x128xf32>
    %68 = vector.broadcast %5 : vector<16x1xf32> to vector<16x128xf32>
    %69 = arith.mulf %17, %68 : vector<16x128xf32>
    %c0_29 = arith.constant 0 : index
    %c0_30 = arith.constant 0 : index
    %70 = vector.load %arg6[%c0_29, %c0_30] : memref<16x128xf32, #tpu.memory_space<vmem>>, vector<16x128xf32>
    tpu.vector_store %arg6[%c0_29, %c0_30], %69 {strides = array<i32>} : memref<16x128xf32, #tpu.memory_space<vmem>>, vector<16x128xf32>,
    %71 = vector.broadcast %5 : vector<16x1xf32> to vector<16x128xf32>
    %72 = arith.mulf %67, %71 : vector<16x128xf32>
    %c0_31 = arith.constant 0 : index
    %c0_32 = arith.constant 0 : index
    %73 = vector.load %arg7[%c0_31, %c0_32] : memref<16x128xf32, #tpu.memory_space<vmem>>, vector<16x128xf32>
    tpu.vector_store %arg7[%c0_31, %c0_32], %72 {strides = array<i32>} : memref<16x128xf32, #tpu.memory_space<vmem>>, vector<16x128xf32>,
    return
  }
  func.func @transform_0(%arg0: i32, %arg1: i32) -> (i32, i32) {
    %c0_i32 = arith.constant 0 : i32
    %c0_i32_0 = arith.constant 0 : i32
    %c0_i32_1 = arith.constant 0 : i32
    return %c0_i32, %c0_i32_0 : i32, i32
  }
  func.func @transform_1(%arg0: i32, %arg1: i32) -> (i32, i32) {
    %c0_i32 = arith.constant 0 : i32
    %c0_i32_0 = arith.constant 0 : i32
    return %c0_i32, %arg0 : i32, i32
  }
  func.func @transform_2(%arg0: i32, %arg1: i32) -> (i32, i32) {
    %c0_i32 = arith.constant 0 : i32
    %c0_i32_0 = arith.constant 0 : i32
    %c0_i32_1 = arith.constant 0 : i32
    return %c0_i32, %c0_i32_0 : i32, i32
  }
  func.func @transform_3(%arg0: i32, %arg1: i32) -> (i32, i32) {
    %c0_i32 = arith.constant 0 : i32
    %c0_i32_0 = arith.constant 0 : i32
    return %c0_i32, %arg0 : i32, i32
  }
  func.func @transform_4(%arg0: i32, %arg1: i32) -> (i32, i32) {
    %c0_i32 = arith.constant 0 : i32
    return %arg1, %arg0 : i32, i32
  }
  func.func @transform_5(%arg0: i32, %arg1: i32) -> (i32, i32) {
    %c0_i32 = arith.constant 0 : i32
    return %arg1, %arg0 : i32, i32
  }
}

</mosaic_0001>

<llo_original>
// kernel: tpu_custom_call.1
$region0: #{tpu_custom_call.1}
  #allocation0 [shape = 'u32[]', space=smem, size = 0x4, offset = 0x4, fixed_abs, tag = 'smem constant byte address 0x4 - core index']
  #allocation1 [shape = 'u32[144,128]{1,0:T(1,128)}', space=vmem, size = 0x12000, scoped, tag = 'internal scratch']
  %s0 = inlined_call_operand.hbm [shape: bf16[16,32], index: 0, kind: input, shape index: {}]
  %s1 = inlined_call_operand.vmem [shape: bf16[32,128], index: 1, kind: input, shape index: {}]
  %s2 = inlined_call_operand.vmem [shape: f32[16,1], index: 2, kind: input, shape index: {}]
  %s3 = inlined_call_operand.vmem [shape: f32[1,128], index: 3, kind: input, shape index: {}]
  %s4 = inlined_call_operand.hbm [shape: f32[16,128], index: 4, kind: output, shape index: {0}]
  %s5 = inlined_call_operand.hbm [shape: f32[16,128], index: 5, kind: output, shape index: {1}]
  %6 = xla_tuple %s4, %s5
  %s7 = sld [smem:[#allocation0]]
  $region38: #{tpu_custom_call.1} parent=0
    _
  %s9 = ssub.s32 1, %s7
  %s10 = scalar_select 0, %s9, %s7
  $region1: #{tpu_custom_call.1} parent=0
    #allocation2 [shape = 'u8[4096]{0}', space=vmem, size = 0x1000, scoped, tag = 'input window, operand 0, single buffered']
    #allocation3 [shape = 's32[1]{0}', space=sflag, size = 0x4, scoped, tag = 'scoped memory for tpu_custom_call.1']
    #allocation4 [shape = 's32[1]{0}', space=sflag, size = 0x4, scoped, tag = 'scoped memory for tpu_custom_call.1']
    #allocation5 [shape = 'u8[8192]{0}', space=vmem, size = 0x2000, scoped, tag = 'output window, operand 0, single buffered']
    #allocation6 [shape = 'u8[8192]{0}', space=vmem, size = 0x2000, scoped, tag = 'output window, operand 1, single buffered']
    #allocation7 [shape = 's32[1]{0}', space=sflag, size = 0x4, scoped, tag = 'scoped memory for tpu_custom_call.1']
    %11 = vsyncpa [#allocation3], 0
    %12 = vsyncpa [#allocation4], 0
    %13 = vsyncpa [#allocation7], 0
    // Predicated region
    $region2: #{tpu_custom_call.1} parent=1 // pred_check
      _
    $region3: #{tpu_custom_call.1} parent=1 // pred_check_branch
      %15 = sbr.rel (0) target = $region5
    $region4: #{tpu_custom_call.1} parent=1 // pred_region
      %s17 = ssub.s32 128, 128
      %18 = vsyncadd [#allocation3], %s17
      %s19 = sshll.u32 [#allocation2], 4
      %s20 = int_to_ptr.vmem [resolvable:$true] %s19
      %25 = dma.hbm_to_vmem [thread:$0]  %s0, 128, %s20, [#allocation3], 64, 64, 4
    $region5: #{tpu_custom_call.1} parent=1 // pred_fallthru
      _
    // Predicated region
    $region6: #{tpu_custom_call.1} parent=1 // pred_check
      _
    $region7: #{tpu_custom_call.1} parent=1 // pred_check_branch
      %27 = sbr.rel (0) target = $region9
    $region8: #{tpu_custom_call.1} parent=1 // pred_region
      _
    $region9: #{tpu_custom_call.1} parent=1 // pred_fallthru
      _
    // Predicated region
    $region10: #{tpu_custom_call.1} parent=1 // pred_check
      _
    $region11: #{tpu_custom_call.1} parent=1 // pred_check_branch
      %29 = sbr.rel (0) target = $region13
    $region12: #{tpu_custom_call.1} parent=1 // pred_region
      _
    $region13: #{tpu_custom_call.1} parent=1 // pred_fallthru
      _
    // Predicated region
    $region14: #{tpu_custom_call.1} parent=1 // pred_check
      _
    $region15: #{tpu_custom_call.1} parent=1 // pred_check_branch
      %31 = sbr.rel (0) target = $region17
    $region16: #{tpu_custom_call.1} parent=1 // pred_region
      _
    $region17: #{tpu_custom_call.1} parent=1 // pred_fallthru
      _
    // Predicated region
    $region18: #{tpu_custom_call.1} parent=1 // pred_check
      _
    $region19: #{tpu_custom_call.1} parent=1 // pred_check_branch
      %33 = sbr.rel (0) target = $region21
    $region20: #{tpu_custom_call.1} parent=1 // pred_region
      %34 = dma.done [#allocation3], 128
    $region21: #{tpu_custom_call.1} parent=1 // pred_fallthru
      _
    %s36 = smul.u32 0, 16
    %s37 = sshra.s32 %s36, 3
    %s38 = sand.u32 %s36, 7
    %s39 = smul.addr %s37, 4
    %s40 = scalar_lea.vmem [#allocation2], %s39
    %v41 = vld [vmem:[%s40] sm:$0xf]
    %v42 = vld [vmem:[%s40 + $0x4] sm:$0xf]
    %s43 = scalar_lea.vmem %s2, %s36
    %v44 = vld [vmem:[%s43] sm:$0xff]
    %v45 = vld [vmem:[%s43 + $0x8] sm:$0xff]
    %v46 = vld [vmem:[%s3] sm:$0x1]
    %v47 = vld [vmem:[%s1] sm:$0xf]
    %v48 = vld [vmem:[%s1 + $0x4] sm:$0xf]
    %v49 = vld [vmem:[%s1 + $0x8] sm:$0xf]
    %v50 = vld [vmem:[%s1 + $0xc] sm:$0xf]
    %v53 = vunpack.c.l.b16 %v41
    %v54 = vunpack.c.l.b16 %v42
    %v55 = vpack.c.b16 %v54, %v53
    %v60 = vunpack.c.l.b16 %v47
    %v61 = vunpack.c.l.b16 %v48
    %v62 = vunpack.c.l.b16 %v49
    %v63 = vunpack.c.l.b16 %v50
    %v64 = vpack.c.b16 %v61, %v60
    %v65 = vpack.c.b16 %v63, %v62
    %vm68 = vcmask 261120
    %v70 = vsel %vm68, %v55, 0
    %72 = vmatprep.subr.bf16.mxu0 0
    %73 = vmatpush1.bf16.msra.mxu0 %v64
    %74 = vmatprep.subr.bf16.mxu0 0
    %75 = vmatpush1.bf16.msra.mxu0 %v65
    %76 = vmatprep.subr.bf16.mxu0 0
    %77 = vmatpush1.bf16.msra.mxu0 0
    %78 = vmatprep.subr.bf16.mxu0 0
    %79 = vmatpush1.bf16.msra.mxu0 0
    %80 = vmatprep.subr.bf16.mxu0 0
    %81 = vmatpush1.bf16.msra.mxu0 0
    %82 = vmatprep.subr.bf16.mxu0 0
    %83 = vmatpush1.bf16.msra.mxu0 0
    %84 = vmatprep.subr.bf16.mxu0 0
    %85 = vmatpush1.bf16.msra.mxu0 0
    %86 = vmatprep.subr.bf16.mxu0 0
    %87 = vmatpush1.bf16.msra.mxu0 0
    %88 = vmatprep.subr.bf16.mxu0 0
    %89 = vmatpush1.bf16.msra.mxu0 0
    %90 = vmatprep.subr.bf16.mxu0 0
    %91 = vmatpush1.bf16.msra.mxu0 0
    %92 = vmatprep.subr.bf16.mxu0 0
    %93 = vmatpush1.bf16.msra.mxu0 0
    %94 = vmatprep.subr.bf16.mxu0 0
    %95 = vmatpush1.bf16.msra.mxu0 0
    %96 = vmatprep.subr.bf16.mxu0 0
    %97 = vmatpush1.bf16.msra.mxu0 0
    %98 = vmatprep.subr.bf16.mxu0 0
    %99 = vmatpush1.bf16.msra.mxu0 0
    %100 = vmatprep.subr.bf16.mxu0 0
    %101 = vmatpush1.bf16.msra.mxu0 0
    %102 = vmatprep.subr.bf16.mxu0 0
    %103 = vmatpush1.bf16.msra.mxu0 0
    %104 = vmatprep.mubr.bf16.mxu0 0
    %105 = vmatmul.mubr.bf16.gmra.mrb[0].mxu0 %v70
    %v106 = vpop.f32.mrb[0].mxu0
    %v107 = vadd.f32 0.0, %v106
    %v108 = vpop.f32.mrb[0].mxu0
    %v109 = vpop.f32.mrb[0].mxu0
    %v110 = vadd.f32 0.0, %v109
    %v111 = vpop.f32.mrb[0].mxu0
    %112 = vdwg.mxu0
    %v113 = vrcp.pop %v44
    %v114 = vrcp.pop %v45
    %v116 = vlaneseq
    %v117 = vshrl.u32 %v116, 7
    %v118 = vsub.s32 0, %v117
    %v119 = vrot.slane %v46, %v118
    %v121 = vmul.f32 %v107, %v119
    %v122 = vmul.f32 %v110, %v119
    %124 = vset.pattern.permute.xlu0 0
    %125 = vperm.xlu0 %124, %v113
    %v126 = vpop.permute.xlu0 %125
    %129 = vset.pattern.permute.xlu0 0
    %130 = vperm.xlu0 %129, %v114
    %v131 = vpop.permute.xlu0 %130
    %v133 = vmul.f32 %v121, %v126
    %v134 = vmul.f32 %v122, %v131
    %v135 = vmax.f32 %v133, -1.0
    %v136 = vmax.f32 %v134, -1.0
    %v137 = vmin.f32 %v135, 1.0
    %v138 = vmin.f32 %v136, 1.0
    %v139 = vmul.f32 %v137, %v137
    %v140 = vmul.f32 %v138, %v138
    %v141 = vmul.f32 %v139, 8.0
    %v142 = vmul.f32 %v140, 8.0
    %v143 = vsub.f32 %v141, 8.0
    %v144 = vsub.f32 %v142, 8.0
    %v145 = vmul.f32 %v143, %v139
    %v146 = vmul.f32 %v144, %v140
    %v147 = vadd.f32 %v145, 1.0
    %v148 = vadd.f32 %v146, 1.0
    %vm149 = vcmp.le.f32.partialorder %v137, 0.70710677
    %vm150 = vcmp.le.f32.partialorder %v138, 0.70710677
    %v151 = vsel %vm149, 1.0, 0.0
    %v152 = vsel %vm150, 1.0, 0.0
    %v153 = vadd.f32 %v151, 0.0
    %v154 = vadd.f32 %v152, 0.0
    %v155 = vsel %vm149, -1.0, 1.0
    %v156 = vsel %vm150, -1.0, 1.0
    %vm157 = vcmp.le.f32.partialorder %v137, 1.7948966e-09
    %vm158 = vcmp.le.f32.partialorder %v138, 1.7948966e-09
    %v159 = vsel %vm157, 1.0, 0.0
    %v160 = vsel %vm158, 1.0, 0.0
    %v161 = vadd.f32 %v153, %v159
    %v162 = vadd.f32 %v154, %v160
    %v163 = vsub.f32 0.0, %v155
    %v164 = vsub.f32 0.0, %v156
    %v165 = vsel %vm157, %v163, %v155
    %v166 = vsel %vm158, %v164, %v156
    %vm167 = vcmp.le.f32.partialorder %v137, -0.70710677
    %vm168 = vcmp.le.f32.partialorder %v138, -0.70710677
    %v169 = vsel %vm167, 1.0, 0.0
    %v170 = vsel %vm168, 1.0, 0.0
    %v171 = vadd.f32 %v161, %v169
    %v172 = vadd.f32 %v162, %v170
    %v173 = vsub.f32 0.0, %v165
    %v174 = vsub.f32 0.0, %v166
    %v175 = vsel %vm167, %v173, %v165
    %v176 = vsel %vm168, %v174, %v166
    %vm177 = vcmp.le.f32.partialorder %v137, -1.0
    %vm178 = vcmp.le.f32.partialorder %v138, -1.0
    %v179 = vsel %vm177, 1.0, 0.0
    %v180 = vsel %vm178, 1.0, 0.0
    %v181 = vadd.f32 %v171, %v179
    %v182 = vadd.f32 %v172, %v180
    %v183 = vsub.f32 0.0, %v175
    %v184 = vsub.f32 0.0, %v176
    %v185 = vsel %vm177, %v183, %v175
    %v186 = vsel %vm178, %v184, %v176
    %v187 = vmul.f32 %v185, %v147
    %v188 = vmul.f32 %v186, %v148
    %v189 = vmul.f32 %v181, 2.0
    %v190 = vmul.f32 %v182, 2.0
    %v191 = vsub.f32 %v187, %v189
    %v192 = vsub.f32 %v188, %v190
    %194 = vset.pattern.permute.xlu0 0
    %195 = vperm.xlu0 %194, %v44
    %v196 = vpop.permute.xlu0 %195
    %199 = vset.pattern.permute.xlu0 0
    %200 = vperm.xlu0 %199, %v45
    %v201 = vpop.permute.xlu0 %200
    %v203 = vmul.f32 %v137, %v196
    %v204 = vmul.f32 %v138, %v201
    %205 = vst [vmem:[#allocation5] sm:$0xff] %v203
    %206 = vst [vmem:[#allocation5 + $0x8] sm:$0xff] %v204
    %v207 = vmul.f32 %v191, %v196
    %v208 = vmul.f32 %v192, %v201
    %209 = vst [vmem:[#allocation6] sm:$0xff] %v207
    %210 = vst [vmem:[#allocation6 + $0x8] sm:$0xff] %v208
    // Predicated region
    $region22: #{tpu_custom_call.1} parent=1 // pred_check
      _
    $region23: #{tpu_custom_call.1} parent=1 // pred_check_branch
      %212 = sbr.rel (0) target = $region25
    $region24: #{tpu_custom_call.1} parent=1 // pred_region
      %s214 = ssub.s32 256, 256
      %215 = vsyncadd [#allocation4], %s214
      %s216 = sshll.u32 [#allocation5], 4
      %s217 = int_to_ptr.vmem [resolvable:$true] %s216
      %222 = dma.vmem_to_hbm [thread:$0]  %s217, 256, %s4, [#allocation4], 128, 128, 8
    $region25: #{tpu_custom_call.1} parent=1 // pred_fallthru
      _
    // Predicated region
    $region26: #{tpu_custom_call.1} parent=1 // pred_check
      _
    $region27: #{tpu_custom_call.1} parent=1 // pred_check_branch
      %224 = sbr.rel (0) target = $region29
    $region28: #{tpu_custom_call.1} parent=1 // pred_region
      %s226 = ssub.s32 256, 256
      %227 = vsyncadd [#allocation7], %s226
      %s228 = sshll.u32 [#allocation6], 4
      %s229 = int_to_ptr.vmem [resolvable:$true] %s228
      %234 = dma.vmem_to_hbm [thread:$0]  %s229, 256, %s5, [#allocation7], 128, 128, 8
    $region29: #{tpu_custom_call.1} parent=1 // pred_fallthru
      _
    // Predicated region
    $region30: #{tpu_custom_call.1} parent=1 // pred_check
      _
    $region31: #{tpu_custom_call.1} parent=1 // pred_check_branch
      %236 = sbr.rel (0) target = $region33
    $region32: #{tpu_custom_call.1} parent=1 // pred_region
      %237 = dma.done [#allocation4], 256
    $region33: #{tpu_custom_call.1} parent=1 // pred_fallthru
      _
    // Predicated region
    $region34: #{tpu_custom_call.1} parent=1 // pred_check
      _
    $region35: #{tpu_custom_call.1} parent=1 // pred_check_branch
      %239 = sbr.rel (0) target = $region37
    $region36: #{tpu_custom_call.1} parent=1 // pred_region
      %240 = dma.done [#allocation7], 256
    $region37: #{tpu_custom_call.1} parent=1 // pred_fallthru
      _
    %241 = vsyncpa [#allocation3], 1
    %242 = vsyncpa [#allocation4], 1
    %243 = vsyncpa [#allocation7], 1

</llo_original>
